<compile_context>
chip_gen: v7x
topology: tpu7x:2x2x1
jax: 0.10.0
libtpu: 0.0.40
codegen_flags: <defaults>
</compile_context>

<pallas_src>
import functools

import jax
import jax.numpy as jnp
from jax.experimental import pallas as pl
from jax.experimental.pallas import tpu as pltpu

PDIST_EPS = 1e-6  # torch.nn.PairwiseDistance default eps
_LANES = 128


def _contrastive_loss_kernel(x1_ref, x2_ref, label_ref, out_ref, acc_ref, *,
                             margin, true_b, tile_b, tiles_per_core, inv_b,
                             need_mask, label_resident):
    c = pl.program_id(0)   # core-split axis ("parallel")
    i = pl.program_id(1)   # batch-tile axis ("arbitrary", carries accumulator)

    @pl.when(i == 0)
    def _():
        acc_ref[...] = jnp.zeros_like(acc_ref)

    # Cast on-chip (free VPU op) rather than in the wrapper (extra HBM traffic).
    x1 = x1_ref[...].astype(jnp.float32)            # (TB, D)
    x2 = x2_ref[...].astype(jnp.float32)            # (TB, D)
    if label_resident:
        start = pl.multiple_of(i * tile_b, tile_b)
        lab = label_ref[pl.ds(start, tile_b), :].astype(jnp.float32)   # (TB, 1)
    else:
        lab = label_ref[...].astype(jnp.float32)                        # (TB, 1)

    diff = x1 - x2 + PDIST_EPS                      # PairwiseDistance adds eps to the diff
    d2 = jnp.sum(diff * diff, axis=-1, keepdims=True)    # (TB, 1)  == distance^2
    d = jnp.sqrt(d2)                                      # (TB, 1)

    hinge = jnp.maximum(margin - d, 0.0)
    per_example = (1.0 - lab) * d2 + lab * (hinge * hinge)   # (TB, 1)

    if need_mask:
        # Mask ragged-tile padding and clamped duplicate tiles (nominal row >= B),
        # applied AFTER sqrt/hinge via where (NaN in discarded branch is fine).
        nominal_row = (c * tiles_per_core + i) * tile_b + jax.lax.broadcasted_iota(
            jnp.int32, per_example.shape, 0)
        per_example = jnp.where(nominal_row < true_b, per_example, 0.0)

    acc_ref[...] += jnp.sum(per_example).reshape(1, 1)

    @pl.when(i == pl.num_programs(1) - 1)
    def _():
        # Per-core partial mean contribution: partial_sum * (1/B).
        out_ref[0] = acc_ref[...] * inv_b


def _sublane_rows(dtype):
    # Native sublane packing: f32 -> 8, bf16 -> 16, int8/fp8 -> 32.
    return max(8, 32 // jnp.dtype(dtype).itemsize)


def _vmem_budget_and_phys():
    """(working-set budget bytes, physical VMEM bytes) for the current TPU."""
    phys = 64 * 1024 * 1024  # conservative default (v7x-class: 64 MiB per TC)
    try:
        info = pltpu.get_tpu_info()
        for attr in ("vmem_capacity_bytes", "vmem_bytes", "vmem_size_bytes"):
            v = getattr(info, attr, None)
            if v:
                phys = int(v)
                break
    except Exception:
        pass
    kind = ""
    try:
        kind = jax.devices()[0].device_kind.lower()
    except Exception:
        pass
    if "v5e" in kind or "v5 lite" in kind or "v5lite" in kind:
        budget = 13 << 20          # v5e: stay near its scoped-VMEM sweet spot
    elif phys <= (96 << 20):
        budget = 40 << 20          # v7x-class: 64 MiB physical per TensorCore
    else:
        budget = 26 << 20          # v6e-class: 128 MiB physical
    return budget, phys


def _choose_tile_rows(B, D, itemsize, budget_bytes, sublane):
    """Largest sublane-aligned batch tile whose lane-padded, double-buffered
    working set fits the per-generation budget (no arbitrary row cap)."""
    if B <= sublane:
        return B
    d_pad = int(pl.cdiv(D, _LANES)) * _LANES
    # Per tile row: x1+x2 = 2 inputs x 2 pipeline buffers x lane-padded row,
    # plus a lane-padded (128-wide) f32 label column x 2 buffers (worst case).
    per_row = 2 * 2 * d_pad * itemsize + 2 * _LANES * 4
    tb = budget_bytes // per_row
    if tb >= B:
        return B
    tb = max(sublane, (tb // sublane) * sublane)
    return int(min(tb, B))


def contrastive_loss(output1, output2, label, margin=2.0, tile_rows=None,
                     num_core_splits=2):
    """Pallas TPU contrastive loss. output1/output2: (B, D); label: (B,) or (B, 1)."""
    B, D = output1.shape
    itemsize = jnp.dtype(output1.dtype).itemsize
    sublane = _sublane_rows(output1.dtype)
    budget, vmem_phys = _vmem_budget_and_phys()

    tb = tile_rows if tile_rows is not None else _choose_tile_rows(
        B, D, itemsize, budget, sublane)
    tb = int(min(tb, B))
    num_tiles = int(pl.cdiv(B, tb))
    n_cores = int(max(1, min(num_core_splits, num_tiles)))
    tiles_per_core = int(pl.cdiv(num_tiles, n_cores))
    padded_b = n_cores * tiles_per_core * tb
    need_mask = padded_b != B

    label2d = label.reshape(B, 1)   # label.view(label.size()[0]) equivalent
    rows_per_core = tiles_per_core * tb
    lab_item = max(jnp.dtype(label2d.dtype).itemsize, 4)

    # Resident label (loaded once per core, sliced in-kernel) when small enough.
    label_resident = rows_per_core * _LANES * lab_item <= (2 << 20)
    if label_resident:
        if padded_b != B:
            label2d = jnp.pad(label2d, ((0, padded_b - B), (0, 0)))
        label_spec = pl.BlockSpec((rows_per_core, 1), lambda c, i: (c, 0))
    else:
        label_spec = pl.BlockSpec(
            (tb, 1),
            lambda c, i: (jnp.minimum(c * tiles_per_core + i, num_tiles - 1), 0))

    # Clamp nominal tile index so a core's extra (duplicate) tile never issues a
    # fully out-of-bounds DMA; its contribution is zeroed by the row mask.
    in_idx = lambda c, i: (jnp.minimum(c * tiles_per_core + i, num_tiles - 1), 0)

    # Lane-padded working-set estimate -> explicit vmem_limit_bytes.
    d_pad = int(pl.cdiv(D, _LANES)) * _LANES
    ws = 2 * 2 * tb * d_pad * itemsize                                   # x1/x2 double-buffered
    ws += 2 * (rows_per_core if label_resident else tb) * _LANES * lab_item
    ws += 4 * 8 * _LANES                                                 # out + acc slack
    # TODO(synk): add a feature-dim (D) tiling fallback for extremely wide D where
    # even the minimal 8/16-row block exceeds the per-core VMEM budget (v7x first).
    vmem_limit = int(min(max(vmem_phys - (2 << 20), 16 << 20),
                         max(ws + (8 << 20), 32 << 20)))

    kernel = functools.partial(
        _contrastive_loss_kernel,
        margin=float(margin),
        true_b=B,
        tile_b=tb,
        tiles_per_core=tiles_per_core,
        inv_b=float(1.0 / B),
        need_mask=need_mask,
        label_resident=label_resident,
    )

    cost = pl.CostEstimate(
        flops=4 * B * D + 8 * B,
        transcendentals=B,
        bytes_accessed=2 * B * D * itemsize + B * lab_item + n_cores * 4,
    )

    out = pl.pallas_call(
        kernel,
        out_shape=jax.ShapeDtypeStruct((n_cores, 1, 1), jnp.float32),
        grid_spec=pltpu.PrefetchScalarGridSpec(
            num_scalar_prefetch=0,
            grid=(n_cores, tiles_per_core),
            in_specs=[
                pl.BlockSpec((tb, D), in_idx),   # x1 tile, full D (reduction axis)
                pl.BlockSpec((tb, D), in_idx),   # x2 tile
                label_spec,                      # label: resident-per-core or tiled
            ],
            out_specs=pl.BlockSpec((1, 1, 1), lambda c, i: (c, 0, 0)),  # per-core partial
            scratch_shapes=[pltpu.VMEM((1, 1), jnp.float32)],           # running sum
        ),
        compiler_params=pltpu.CompilerParams(
            # axis 0: core split (independent partials) -> parallel;
            # axis 1: carries the per-core accumulator -> arbitrary.
            dimension_semantics=("parallel", "arbitrary"),
            vmem_limit_bytes=vmem_limit,
        ),
        cost_estimate=cost,
    )(output1, output2, label2d)

    # Sum the per-core partial means (each already scaled by 1/B).
    return jnp.sum(out)


def _reference_loss(output1, output2, label, margin=2.0):
    # Pure-JAX reference mirroring the PyTorch forward.
    label = label.reshape(label.shape[0]).astype(jnp.float32)
    x1 = output1.astype(jnp.float32)
    x2 = output2.astype(jnp.float32)
    diff = x1 - x2 + PDIST_EPS
    d = jnp.sqrt(jnp.sum(diff * diff, axis=-1))
    return jnp.mean((1.0 - label) * d**2 + label * jnp.maximum(margin - d, 0.0) ** 2)


if __name__ == "__main__":
    key = jax.random.PRNGKey(0)

    # Test 1: small shapes consistent with the module (single tile, single core split).
    k1, k2, k3 = jax.random.split(key, 3)
    B, D = 8, 32
    o1 = jax.random.normal(k1, (B, D), dtype=jnp.float32)
    o2 = jax.random.normal(k2, (B, D), dtype=jnp.float32)
    lab = jax.random.bernoulli(k3, 0.5, (B, 1)).astype(jnp.float32)

    loss = jax.block_until_ready(contrastive_loss(o1, o2, lab, margin=2.0))
    ref = _reference_loss(o1, o2, lab, margin=2.0)
    assert jnp.allclose(loss, ref, rtol=1e-5, atol=1e-5), (loss, ref)

    # Test 2: ragged bf16 batch with a forced small tile to exercise the dual-core
    # split, per-core partial sums, clamped duplicate tile, and row masking.
    k4, k5, k6 = jax.random.split(jax.random.PRNGKey(1), 3)
    B2, D2 = 200, 128
    o1b = jax.random.normal(k4, (B2, D2), dtype=jnp.bfloat16)
    o2b = jax.random.normal(k5, (B2, D2), dtype=jnp.bfloat16)
    labb = jax.random.bernoulli(k6, 0.5, (B2,)).astype(jnp.float32)

    loss2 = jax.block_until_ready(
        contrastive_loss(o1b, o2b, labb, margin=2.0, tile_rows=48))
    ref2 = _reference_loss(o1b, o2b, labb, margin=2.0)
    assert jnp.allclose(loss2, ref2, rtol=2e-2, atol=2e-2), (loss2, ref2)

    print("KERNEL_OK")
</pallas_src>

<mosaic_0001>
module attributes {stable_mosaic.version = 11 : i64} {
  func.func @_contrastive_loss_kernel(%arg0: i32, %arg1: i32, %arg2: memref<8x32xf32, #tpu.memory_space<vmem>>, %arg3: memref<8x32xf32, #tpu.memory_space<vmem>>, %arg4: memref<8x1xf32, #tpu.memory_space<vmem>>, %arg5: memref<1x1x1xf32, #tpu.memory_space<vmem>>, %arg6: memref<1x1xf32, #tpu.memory_space<vmem>>) attributes {dimension_semantics = [#tpu.dimension_semantics<parallel>, #tpu.dimension_semantics<arbitrary>], iteration_bounds = array<i64: 1, 1>, scalar_prefetch = 0 : i64, scratch_operands = 1 : i64, tpu.core_type = #tpu.core_type<tc>, window_params = [{transform_indices = @transform_0, window_bounds = array<i64: 8, 32>}, {transform_indices = @transform_1, window_bounds = array<i64: 8, 32>}, {transform_indices = @transform_2, window_bounds = array<i64: 8, 1>}, {transform_indices = @transform_3, window_bounds = array<i64: 1, 1, 1>}]} {
    %c0_i32 = arith.constant 0 : i32
    %0 = arith.cmpi eq, %arg1, %c0_i32 : i32
    %1 = arith.extui %0 : i1 to i32
    %c0_i32_0 = arith.constant 0 : i32
    %2 = arith.cmpi ne, %1, %c0_i32_0 : i32
    scf.if %2 {
      %cst_16 = arith.constant 0.000000e+00 : f32
      %37 = vector.broadcast %cst_16 : f32 to vector<1x1xf32>
      %c0_17 = arith.constant 0 : index
      %c0_18 = arith.constant 0 : index
      %38 = vector.load %arg6[%c0_17, %c0_18] : memref<1x1xf32, #tpu.memory_space<vmem>>, vector<1x1xf32>
      tpu.vector_store %arg6[%c0_17, %c0_18], %37 {strides = array<i32>} : memref<1x1xf32, #tpu.memory_space<vmem>>, vector<1x1xf32>,
    } else {
    }
    %c0 = arith.constant 0 : index
    %c0_1 = arith.constant 0 : index
    %3 = vector.load %arg2[%c0, %c0_1] : memref<8x32xf32, #tpu.memory_space<vmem>>, vector<8x32xf32>
    %c0_2 = arith.constant 0 : index
    %c0_3 = arith.constant 0 : index
    %4 = vector.load %arg3[%c0_2, %c0_3] : memref<8x32xf32, #tpu.memory_space<vmem>>, vector<8x32xf32>
    %c8_i32 = arith.constant 8 : i32
    %5 = arith.muli %arg1, %c8_i32 : i32
    %6 = tpu.assume_multiple %5, 8 : i32
    %7 = arith.index_cast %6 : i32 to index
    %c0_4 = arith.constant 0 : index
    %8 = vector.load %arg4[%7, %c0_4] : memref<8x1xf32, #tpu.memory_space<vmem>>, vector<8x1xf32>
    %9 = arith.subf %3, %4 : vector<8x32xf32>
    %cst = arith.constant 9.99999997E-7 : f32
    %10 = vector.broadcast %cst : f32 to vector<8x32xf32>
    %11 = arith.addf %9, %10 : vector<8x32xf32>
    %12 = arith.mulf %11, %11 : vector<8x32xf32>
    %cst_5 = arith.constant dense<0.000000e+00> : vector<8xf32>
    %13 = vector.multi_reduction <add>, %12, %cst_5 [1] : vector<8x32xf32> to vector<8xf32>
    %14 = vector.shape_cast %13 : vector<8xf32> to vector<8x1xf32>
    %15 = math.sqrt %14 : vector<8x1xf32>
    %cst_6 = arith.constant 2.000000e+00 : f32
    %16 = vector.broadcast %cst_6 : f32 to vector<8x1xf32>
    %17 = arith.subf %16, %15 : vector<8x1xf32>
    %cst_7 = arith.constant 0.000000e+00 : f32
    %18 = vector.broadcast %cst_7 : f32 to vector<8x1xf32>
    %19 = arith.maximumf %17, %18 : vector<8x1xf32>
    %cst_8 = arith.constant 1.000000e+00 : f32
    %20 = vector.broadcast %cst_8 : f32 to vector<8x1xf32>
    %21 = arith.subf %20, %8 : vector<8x1xf32>
    %22 = arith.mulf %21, %14 : vector<8x1xf32>
    %23 = arith.mulf %19, %19 : vector<8x1xf32>
    %24 = arith.mulf %8, %23 : vector<8x1xf32>
    %25 = arith.addf %22, %24 : vector<8x1xf32>
    %c0_9 = arith.constant 0 : index
    %c0_10 = arith.constant 0 : index
    %26 = vector.load %arg6[%c0_9, %c0_10] : memref<1x1xf32, #tpu.memory_space<vmem>>, vector<1x1xf32>
    %27 = vector.shape_cast %25 : vector<8x1xf32> to vector<1x8x1xf32>
    %cst_11 = arith.constant dense<0.000000e+00> : vector<1xf32>
    %28 = vector.multi_reduction <add>, %27, %cst_11 [1, 2] : vector<1x8x1xf32> to vector<1xf32>
    %29 = vector.shape_cast %28 : vector<1xf32> to vector<1x1x1xf32>
    %30 = vector.extract %29[0, 0, 0] : f32 from vector<1x1x1xf32>
    %31 = vector.broadcast %30 : f32 to vector<1x1xf32>
    %32 = arith.addf %26, %31 : vector<1x1xf32>
    %c0_12 = arith.constant 0 : index
    %c0_13 = arith.constant 0 : index
    %33 = vector.load %arg6[%c0_12, %c0_13] : memref<1x1xf32, #tpu.memory_space<vmem>>, vector<1x1xf32>
    tpu.vector_store %arg6[%c0_12, %c0_13], %32 {strides = array<i32>} : memref<1x1xf32, #tpu.memory_space<vmem>>, vector<1x1xf32>,
    %c0_i32_14 = arith.constant 0 : i32
    %34 = arith.cmpi eq, %arg1, %c0_i32_14 : i32
    %35 = arith.extui %34 : i1 to i32
    %c0_i32_15 = arith.constant 0 : i32
    %36 = arith.cmpi ne, %35, %c0_i32_15 : i32
    scf.if %36 {
      %c0_16 = arith.constant 0 : index
      %c0_17 = arith.constant 0 : index
      %37 = vector.load %arg6[%c0_16, %c0_17] : memref<1x1xf32, #tpu.memory_space<vmem>>, vector<1x1xf32>
      %cst_18 = arith.constant 1.250000e-01 : f32
      %38 = vector.broadcast %cst_18 : f32 to vector<1x1xf32>
      %39 = arith.mulf %37, %38 : vector<1x1xf32>
      %c0_19 = arith.constant 0 : index
      %c0_20 = arith.constant 0 : index
      %c0_21 = arith.constant 0 : index
      %40 = vector.load %arg5[%c0_19, %c0_20, %c0_21] : memref<1x1x1xf32, #tpu.memory_space<vmem>>, vector<1x1x1xf32>
      %41 = vector.shape_cast %40 : vector<1x1x1xf32> to vector<1x1xf32>
      %42 = vector.shape_cast %39 : vector<1x1xf32> to vector<1x1x1xf32>
      tpu.vector_store %arg5[%c0_19, %c0_20, %c0_21], %42 {strides = array<i32>} : memref<1x1x1xf32, #tpu.memory_space<vmem>>, vector<1x1x1xf32>,
    } else {
    }
    return
  }
  func.func @transform_0(%arg0: i32, %arg1: i32) -> (i32, i32) {
    %c1_i32 = arith.constant 1 : i32
    %0 = arith.muli %arg0, %c1_i32 : i32
    %1 = arith.addi %0, %arg1 : i32
    %c0_i32 = arith.constant 0 : i32
    %2 = arith.minsi %1, %c0_i32 : i32
    %c0_i32_0 = arith.constant 0 : i32
    %c0_i32_1 = arith.constant 0 : i32
    return %2, %c0_i32_0 : i32, i32
  }
  func.func @transform_1(%arg0: i32, %arg1: i32) -> (i32, i32) {
    %c1_i32 = arith.constant 1 : i32
    %0 = arith.muli %arg0, %c1_i32 : i32
    %1 = arith.addi %0, %arg1 : i32
    %c0_i32 = arith.constant 0 : i32
    %2 = arith.minsi %1, %c0_i32 : i32
    %c0_i32_0 = arith.constant 0 : i32
    %c0_i32_1 = arith.constant 0 : i32
    return %2, %c0_i32_0 : i32, i32
  }
  func.func @transform_2(%arg0: i32, %arg1: i32) -> (i32, i32) {
    %c0_i32 = arith.constant 0 : i32
    %c0_i32_0 = arith.constant 0 : i32
    return %arg0, %c0_i32 : i32, i32
  }
  func.func @transform_3(%arg0: i32, %arg1: i32) -> (i32, i32, i32) {
    %c0_i32 = arith.constant 0 : i32
    %c0_i32_0 = arith.constant 0 : i32
    %c0_i32_1 = arith.constant 0 : i32
    return %arg0, %c0_i32, %c0_i32_0 : i32, i32, i32
  }
}

</mosaic_0001>

<llo_original>
// kernel: tpu_custom_call.1
$region0: #{tpu_custom_call.1}
  #allocation0 [shape = 'u32[]', space=smem, size = 0x4, offset = 0x4, fixed_abs, tag = 'smem constant byte address 0x4 - core index']
  #allocation1 [shape = 'u32[144,128]{1,0:T(1,128)}', space=vmem, size = 0x12000, scoped, tag = 'internal scratch']
  #allocation2 [shape = 'f32[1,1]{1,0:T(1,128)}', space=vmem, size = 0x200, scoped, tag = 'scratch operand']
  %s0 = inlined_call_operand.vmem [shape: f32[8,32], index: 0, kind: input, shape index: {}]
  %s1 = inlined_call_operand.hbm [shape: f32[8,32], index: 1, kind: input, shape index: {}]
  %s2 = inlined_call_operand.vmem [shape: f32[8,1], index: 2, kind: input, shape index: {}]
  %s3 = inlined_call_operand.hbm [shape: f32[1,1,1], index: 3, kind: output, shape index: {}]
  %s4 = sld [smem:[#allocation0]]
  $region34: #{tpu_custom_call.1} parent=0
    _
  %s6 = ssub.s32 1, %s4
  %s7 = scalar_select 0, %s6, %s4
  $region1: #{tpu_custom_call.1} parent=0
    #allocation3 [shape = 'u8[4096]{0}', space=vmem, size = 0x1000, scoped, tag = 'input window, operand 1, single buffered']
    #allocation4 [shape = 's32[1]{0}', space=sflag, size = 0x4, scoped, tag = 'scoped memory for tpu_custom_call.1']
    #allocation5 [shape = 's32[1]{0}', space=sflag, size = 0x4, scoped, tag = 'scoped memory for tpu_custom_call.1']
    #allocation6 [shape = 'u8[512]{0}', space=vmem, size = 0x400, scoped, tag = 'output window, operand 0, single buffered']
    %8 = vsyncpa [#allocation4], 0
    %9 = vsyncpa [#allocation5], 0
    // Predicated region
    $region2: #{tpu_custom_call.1} parent=1 // pred_check
      _
    $region3: #{tpu_custom_call.1} parent=1 // pred_check_branch
      %11 = sbr.rel (0) target = $region5
    $region4: #{tpu_custom_call.1} parent=1 // pred_region
      %s12 = sadd.s32 0, 0
      %p13 = scmp.lt.s32.totalorder %s12, 0
      %s14 = scalar_select %p13, %s12, 0
      %p15 = scmp.lt.s32.totalorder %s14, 0
      %s16 = scalar_select %p15, %s14, 0
      %s17 = smul.addr %s16, 8
      %s18 = scalar_lea.vmem %s0, %s17
      %s19 = sadd.s32 0, 0
      %p20 = scmp.lt.s32.totalorder %s19, 0
      %s21 = scalar_select %p20, %s19, 0
    $region5: #{tpu_custom_call.1} parent=1 // pred_fallthru
      _
    // Predicated region
    $region6: #{tpu_custom_call.1} parent=1 // pred_check
      _
    $region7: #{tpu_custom_call.1} parent=1 // pred_check_branch
      %23 = sbr.rel (0) target = $region9
    $region8: #{tpu_custom_call.1} parent=1 // pred_region
      %s24 = sadd.s32 0, 0
      %p25 = scmp.lt.s32.totalorder %s24, 0
      %s26 = scalar_select %p25, %s24, 0
      %s28 = ssub.s32 128, 128
      %29 = vsyncadd [#allocation4], %s28
      %s30 = smul.addr %s26, 128
      %s31 = scalar_lea.hbm %s1, %s30
      %s33 = sshll.u32 [#allocation3], 4
      %s34 = int_to_ptr.vmem [resolvable:$true] %s33
      %36 = dma.hbm_to_vmem [thread:$0]  %s31, 128, %s34, [#allocation4]
    $region9: #{tpu_custom_call.1} parent=1 // pred_fallthru
      _
    // Predicated region
    $region10: #{tpu_custom_call.1} parent=1 // pred_check
      _
    $region11: #{tpu_custom_call.1} parent=1 // pred_check_branch
      %38 = sbr.rel (0) target = $region13
    $region12: #{tpu_custom_call.1} parent=1 // pred_region
      _
    $region13: #{tpu_custom_call.1} parent=1 // pred_fallthru
      _
    // Predicated region
    $region14: #{tpu_custom_call.1} parent=1 // pred_check
      _
    $region15: #{tpu_custom_call.1} parent=1 // pred_check_branch
      %40 = sbr.rel (0) target = $region17
    $region16: #{tpu_custom_call.1} parent=1 // pred_region
      %41 = dma.done [#allocation4], 128
    $region17: #{tpu_custom_call.1} parent=1 // pred_fallthru
      _
    %s42 = sadd.s32 0, 0
    %p43 = scmp.lt.s32.totalorder %s42, 0
    %s44 = scalar_select %p43, %s42, 0
    %p45 = scmp.lt.s32.totalorder %s44, 0
    %s46 = scalar_select %p45, %s44, 0
    %s47 = smul.addr %s46, 8
    %s48 = scalar_lea.vmem %s0, %s47
    %s49 = sadd.s32 0, 0
    %p50 = scmp.lt.s32.totalorder %s49, 0
    %s51 = scalar_select %p50, %s49, 0
    %p52 = scmp.lt.s32.totalorder %s51, 0
    %s53 = scalar_select %p52, %s51, 0
    %s54 = smul.addr %s53, 8
    %s55 = scalar_lea.vmem %s0, %s54
    %s56 = sadd.s32 0, 0
    %p57 = scmp.lt.s32.totalorder %s56, 0
    %s58 = scalar_select %p57, %s56, 0
    %s59 = sadd.s32 0, 0
    %p60 = scmp.lt.s32.totalorder %s59, 0
    %s61 = scalar_select %p60, %s59, 0
    %p62 = scmp.eq.s32.totalorder 0, 0
    // Predicated region
    $region18: #{tpu_custom_call.1} parent=1 // pred_check
      %p63 = pneg %p62
    $region19: #{tpu_custom_call.1} parent=1 // pred_check_branch
      %65 = sbr.rel (%p63) target = $region21
    $region20: #{tpu_custom_call.1} parent=1 // pred_region
      %vm66 = vcmask 0
      %67 = vst.msk [vmem:[#allocation2] sm:$0x1] %vm66, 0.0
    $region21: #{tpu_custom_call.1} parent=1 // pred_fallthru
      _
    %v68 = vld [vmem:[%s55] sm:$0xff]
    %v69 = vld [vmem:[#allocation3] sm:$0xff]
    %s70 = smul.u32 0, 8
    %s71 = scalar_lea.vmem %s2, %s70
    %v72 = vld [vmem:[%s71] sm:$0xff]
    %v73 = vsub.f32 %v68, %v69
    %v74 = vadd.f32 %v73, 1e-06
    %v75 = vmul.f32 %v74, %v74
    %vm76 = vcmask 261120
    %v77 = vsel %vm76, %v75, 0.0
    %78 = vadd.xlane.f32.xlu0 %v77
    %v79 = vpop.xlane.xlu0 %78
    %v80 = vrsqrt.pop %v79
    %v81 = vmul.f32 %v79, %v80
    %vm82 = vcmp.eq.f32.partialorder %v79, inf
    %v83 = vsel %vm82, %v79, %v81
    %vm84 = vcmp.eq.f32.partialorder %v79, 0.0
    %v85 = vand.u32 %v79, 2147483648
    %v86 = vsel %vm84, %v85, %v83
    %v87 = vsub.f32 2.0, %v86
    %v88 = vmax.f32 %v87, 0.0
    %v89 = vsub.f32 1.0, %v72
    %v90 = vmul.f32 %v89, %v79
    %v91 = vmul.f32 %v88, %v88
    %v92 = vmul.f32 %v72, %v91
    %v93 = vadd.f32 %v90, %v92
    %v94 = vld [vmem:[#allocation2] sm:$0x1]
    %vm95 = vcmask 7168
    %v96 = vsel %vm95, %v93, 0.0
    %97 = vadd.xlane.f32.xlu0 %v96
    %v98 = vpop.xlane.xlu0 %97
    %v99 = vrot.slane %v98, 4
    %v100 = vadd.f32 %v98, %v99
    %v101 = vrot.slane %v100, 2
    %v102 = vadd.f32 %v100, %v101
    %v103 = vrot.slane %v102, 1
    %v104 = vadd.f32 %v102, %v103
    %s105 = vtos %v104
    %v106 = vstv %s105
    %v107 = vadd.f32 %v94, %v106
    %vm108 = vcmask 0
    %109 = vst.msk [vmem:[#allocation2] sm:$0x1] %vm108, %v107
    // Predicated region
    $region22: #{tpu_custom_call.1} parent=1 // pred_check
      %p110 = pneg %p62
    $region23: #{tpu_custom_call.1} parent=1 // pred_check_branch
      %112 = sbr.rel (%p110) target = $region25
    $region24: #{tpu_custom_call.1} parent=1 // pred_region
      %v113 = vld [vmem:[#allocation2] sm:$0x1]
      %v114 = vmul.f32 %v113, 0.125
      %115 = vst.msk [vmem:[#allocation6] sm:$0x1] %vm108, %v114
    $region25: #{tpu_custom_call.1} parent=1 // pred_fallthru
      _
    // Predicated region
    $region26: #{tpu_custom_call.1} parent=1 // pred_check
      _
    $region27: #{tpu_custom_call.1} parent=1 // pred_check_branch
      %117 = sbr.rel (0) target = $region29
    $region28: #{tpu_custom_call.1} parent=1 // pred_region
      %s119 = ssub.s32 16, 16
      %120 = vsyncadd [#allocation5], %s119
      %s122 = sshll.u32 [#allocation6], 4
      %s123 = int_to_ptr.vmem [resolvable:$true] %s122
      %125 = dma.vmem_to_hbm [thread:$0]  %s123, 16, %s3, [#allocation5]
    $region29: #{tpu_custom_call.1} parent=1 // pred_fallthru
      _
    // Predicated region
    $region30: #{tpu_custom_call.1} parent=1 // pred_check
      _
    $region31: #{tpu_custom_call.1} parent=1 // pred_check_branch
      %127 = sbr.rel (0) target = $region33
    $region32: #{tpu_custom_call.1} parent=1 // pred_region
      %128 = dma.done [#allocation5], 16
    $region33: #{tpu_custom_call.1} parent=1 // pred_fallthru
      _
    %129 = vsyncpa [#allocation4], 1
    %130 = vsyncpa [#allocation5], 1

</llo_original>
